<compile_context>
chip_gen: v7x
topology: tpu7x:2x2x1
jax: 0.10.0
libtpu: 0.0.40
codegen_flags: <defaults>
</compile_context>

<pallas_src>
import jax
import jax.numpy as jnp
from jax.experimental import pallas as pl
from jax.experimental.pallas import tpu as pltpu

SAFE_LOG_EPS = 1e-7  # TODO(synk): `safe_log` is not defined in flow.py; using log(x + 1e-7).


def normalizing_flow_kernel(z_ref, w_ref, s_ref, b_ref, gdiag_ref, glow_ref,
                            zk_ref, lj_ref):
    """One batch tile of the full planar-flow chain (lane-dense [L, TB] layout).

    z_ref     : [TB, D]  input latent tile
    w_ref     : [L, D]   per-flow weight rows  (replicated across grid)
    s_ref     : [L, D]   per-flow scale rows   (replicated across grid)
    b_ref     : [L, 1]   per-flow biases
    gdiag_ref : [L, 1]   gdiag[l]   = w_l . s_l   (feeds the log-det)
    glow_ref  : [L, L]   glow[m, j] = s_j . w_m for m > j, else 0 (t_j -> act_m coupling)
    zk_ref    : [TB, D]  transformed latent tile
    lj_ref    : [L, TB]  log|det dJ| (row l = flow l), lane-dense
    """
    z0 = z_ref[...].astype(jnp.float32)                          # [TB, D]
    w = w_ref[...].astype(jnp.float32)                           # [L, D]
    s = s_ref[...].astype(jnp.float32)                           # [L, D]
    glow = glow_ref[...].astype(jnp.float32)                     # [L, L]

    # act[l, :] = w_l . z0 + b_l  -- one MXU matmul + one full-width bias add.
    act = jnp.einsum("ld,bd->lb", w, z0,
                     preferred_element_type=jnp.float32) + b_ref[...]   # [L, TB]

    num_flows = w.shape[0]
    t_rows = []
    # Static unrolled loop over the (small) flow chain; the only sequential
    # dependency is the tanh recurrence itself.
    for l in range(num_flows):
        t_l = jnp.tanh(act[l:l + 1, :])                          # [1, TB], lane-dense
        t_rows.append(t_l)
        if l + 1 < num_flows:
            # Rank-1 full-width update: act[m, :] += (s_l . w_m) * t_l for m > l.
            act = act + glow[:, l:l + 1] * t_l                   # [L, TB]

    t_mat = jnp.concatenate(t_rows, axis=0)                      # [L, TB]

    # Batched log-det: det_l = 1 + (1 - tanh(act_l)^2) * (w_l . s_l), evaluated
    # on the pre-transform z of each flow, exactly as in the PyTorch module.
    det = 1.0 + (1.0 - t_mat * t_mat) * gdiag_ref[...]           # [L, TB]
    lj_ref[...] = jnp.log(jnp.abs(det) + SAFE_LOG_EPS)           # one lane-dense store

    # zk = z0 + sum_l s_l * t_l  ==  z0 + T^T @ S  (MXU matmul).
    zk = z0 + jnp.einsum("lb,ld->bd", t_mat, s,
                         preferred_element_type=jnp.float32)     # [TB, D]
    zk_ref[...] = zk.astype(zk_ref.dtype)


def _auto_block_b(batch, dim, itemsize, vmem_budget):
    """Largest lane-aligned batch tile that (a) fits the VMEM budget and
    (b) leaves >= 2 grid steps for large batches (v7x TC sharding / DMA overlap)."""
    # Pipelined working set per batch row: double-buffered z-in + zk-out tiles
    # plus the f32 intermediates (z0, zk, matmul operands) live in the body.
    per_row = 4 * dim * itemsize + 6 * dim * 4
    cap = (vmem_budget * 3 // 4) // max(per_row, 1)
    cap = int(max(128, min(1024, (cap // 128) * 128)))
    half = ((batch // 2) // 128) * 128
    if half >= 128:
        cap = min(cap, half)
    return batch if cap >= batch else cap


def normalizing_flow(z, weights, biases, scales, *, block_b=None):
    """Pallas forward of NormalizingFlow.

    Returns (zk, [log_jacobian_0, ..., log_jacobian_{L-1}]); each lj is [B, 1].
    """
    B, D = z.shape
    L = weights.shape[0]
    itemsize = jnp.dtype(z.dtype).itemsize

    # Per-generation VMEM budget (v7x: 64 MiB physical; v5e/v6e: 128 MiB).
    try:
        vmem_cap = int(pltpu.get_tpu_info().vmem_capacity_bytes)
    except Exception:
        vmem_cap = 64 * 1024 * 1024  # conservative fallback, safe on every chip
    vmem_limit = int(min(max(vmem_cap * 6 // 10, 32 * 1024 * 1024), 100 * 1024 * 1024))

    if block_b is None:
        block_b = _auto_block_b(B, D, itemsize, vmem_limit)
    block_b = min(block_b, B)
    if block_b < B:
        # Tiled path: keep z sublanes (x8) and lj lanes (x128) aligned.
        block_b = min(max(128, (block_b // 128) * 128), B)
    grid = (pl.cdiv(B, block_b),)

    # Hoisted, parameter-only precompute (once per call, outside the kernel).
    w32 = weights.astype(jnp.float32)                            # [L, D]
    s32 = scales.astype(jnp.float32)                             # [L, D]
    b_col = biases.astype(jnp.float32).reshape(L, 1)             # [L, 1]
    # g[j, m] = s_j . w_m ; exact f32 since its diagonal feeds the log-det.
    g = jnp.dot(s32, w32.T, precision=jax.lax.Precision.HIGHEST)  # [L, L]
    g_diag = jnp.diagonal(g).reshape(L, 1)                       # [L, 1] = w_l . s_l
    g_low = jnp.tril(g.T, k=-1)                                  # [L, L] strictly lower

    cost = pl.CostEstimate(
        flops=4 * B * D * L + 4 * B * L * L + 8 * B * L,         # two matmuls + recurrence
        transcendentals=2 * B * L,                               # tanh + log per flow/row
        bytes_accessed=2 * B * D * itemsize + B * L * 4 + 3 * L * D * 4,
    )

    zk, lj = pl.pallas_call(
        normalizing_flow_kernel,
        out_shape=(
            jax.ShapeDtypeStruct((B, D), z.dtype),
            jax.ShapeDtypeStruct((L, B), jnp.float32),
        ),
        grid=grid,
        in_specs=[
            pl.BlockSpec((block_b, D), lambda i: (i, 0)),        # z tile
            pl.BlockSpec((L, D), lambda i: (0, 0)),              # W  (lane-dense, replicated)
            pl.BlockSpec((L, D), lambda i: (0, 0)),              # S  (replicated)
            pl.BlockSpec((L, 1), lambda i: (0, 0)),              # biases
            pl.BlockSpec((L, 1), lambda i: (0, 0)),              # diag(G)
            pl.BlockSpec((L, L), lambda i: (0, 0)),              # strictly-lower G^T
        ],
        out_specs=(
            pl.BlockSpec((block_b, D), lambda i: (i, 0)),        # zk tile
            pl.BlockSpec((L, block_b), lambda i: (0, i)),        # lj tile (lane-dense)
        ),
        compiler_params=pltpu.CompilerParams(
            dimension_semantics=("parallel",),                   # batch sharded across TCs
            vmem_limit_bytes=vmem_limit,
        ),
        cost_estimate=cost,
    )(z, w32, s32, b_col, g_diag, g_low)

    return zk, [lj[l][:, None] for l in range(L)]


def _reference(z, weights, biases, scales):
    """Pure-JAX reference mirroring the PyTorch module (exact-f32 matmuls)."""
    hp = jax.lax.Precision.HIGHEST
    log_jacs = []
    for l in range(weights.shape[0]):
        w = weights[l]            # [D]
        s = scales[l]             # [D]
        b = biases[l, 0]
        act = jnp.dot(z, w[:, None], precision=hp) + b           # [B, 1]
        t = jnp.tanh(act)
        psi = (1.0 - t * t) * w[None, :]                         # [B, D]
        det = 1.0 + jnp.dot(psi, s[:, None], precision=hp)       # [B, 1]
        log_jacs.append(jnp.log(jnp.abs(det) + SAFE_LOG_EPS))
        z = z + s[None, :] * t
    return z, log_jacs


if __name__ == "__main__":
    B, D, L = 256, 32, 4

    key = jax.random.PRNGKey(0)
    kz, kw, kb, ks = jax.random.split(key, 4)

    # Deterministic parameter init matching reset_parameters(): U(-0.01, 0.01).
    weights = jax.random.uniform(kw, (L, D), jnp.float32, -0.01, 0.01)
    biases = jax.random.uniform(kb, (L, 1), jnp.float32, -0.01, 0.01)
    scales = jax.random.uniform(ks, (L, D), jnp.float32, -0.01, 0.01)

    z = jax.random.normal(kz, (B, D), jnp.float32)

    # Auto tiling picks block_b=128 here -> 2 grid steps (pipelined, TC-sharded).
    zk, log_jacobians = normalizing_flow(z, weights, biases, scales)
    zk = jax.block_until_ready(zk)
    log_jacobians = [jax.block_until_ready(lj) for lj in log_jacobians]

    # Sanity check against a pure-JAX reference of the PyTorch module.
    zk_ref, lj_ref = _reference(z, weights, biases, scales)
    assert zk.shape == (B, D)
    assert all(lj.shape == (B, 1) for lj in log_jacobians)
    assert jnp.allclose(zk, zk_ref, atol=5e-5, rtol=5e-5), \
        float(jnp.max(jnp.abs(zk - zk_ref)))
    for a, r in zip(log_jacobians, lj_ref):
        assert jnp.allclose(a, r, atol=5e-5, rtol=5e-5), \
            float(jnp.max(jnp.abs(a - r)))

    print("KERNEL_OK")
</pallas_src>

<mosaic_0001>
module attributes {stable_mosaic.version = 11 : i64} {
  func.func @normalizing_flow_kernel(%arg0: i32, %arg1: memref<128x32xf32, #tpu.memory_space<vmem>>, %arg2: memref<4x32xf32, #tpu.memory_space<vmem>>, %arg3: memref<4x32xf32, #tpu.memory_space<vmem>>, %arg4: memref<4x1xf32, #tpu.memory_space<vmem>>, %arg5: memref<4x1xf32, #tpu.memory_space<vmem>>, %arg6: memref<4x4xf32, #tpu.memory_space<vmem>>, %arg7: memref<128x32xf32, #tpu.memory_space<vmem>>, %arg8: memref<4x128xf32, #tpu.memory_space<vmem>>) attributes {dimension_semantics = [#tpu.dimension_semantics<parallel>], iteration_bounds = array<i64: 2>, scalar_prefetch = 0 : i64, scratch_operands = 0 : i64, tpu.core_type = #tpu.core_type<tc>, window_params = [{transform_indices = @transform_0, window_bounds = array<i64: 128, 32>}, {pipeline_mode = #tpu.pipeline_mode<synchronous>, transform_indices = @transform_1, window_bounds = array<i64: 4, 32>}, {pipeline_mode = #tpu.pipeline_mode<synchronous>, transform_indices = @transform_2, window_bounds = array<i64: 4, 32>}, {pipeline_mode = #tpu.pipeline_mode<synchronous>, transform_indices = @transform_3, window_bounds = array<i64: 4, 1>}, {pipeline_mode = #tpu.pipeline_mode<synchronous>, transform_indices = @transform_4, window_bounds = array<i64: 4, 1>}, {pipeline_mode = #tpu.pipeline_mode<synchronous>, transform_indices = @transform_5, window_bounds = array<i64: 4, 4>}, {transform_indices = @transform_6, window_bounds = array<i64: 128, 32>}, {transform_indices = @transform_7, window_bounds = array<i64: 4, 128>}]} {
    %c0 = arith.constant 0 : index
    %c0_0 = arith.constant 0 : index
    %0 = vector.load %arg1[%c0, %c0_0] : memref<128x32xf32, #tpu.memory_space<vmem>>, vector<128x32xf32>
    %c0_1 = arith.constant 0 : index
    %c0_2 = arith.constant 0 : index
    %1 = vector.load %arg2[%c0_1, %c0_2] : memref<4x32xf32, #tpu.memory_space<vmem>>, vector<4x32xf32>
    %c0_3 = arith.constant 0 : index
    %c0_4 = arith.constant 0 : index
    %2 = vector.load %arg3[%c0_3, %c0_4] : memref<4x32xf32, #tpu.memory_space<vmem>>, vector<4x32xf32>
    %c0_5 = arith.constant 0 : index
    %c0_6 = arith.constant 0 : index
    %3 = vector.load %arg6[%c0_5, %c0_6] : memref<4x4xf32, #tpu.memory_space<vmem>>, vector<4x4xf32>
    "tpu.trace_start"() <{level = 10 : i32, message = "ld,bd->lb"}> : () -> ()
    %cst = arith.constant dense<0.000000e+00> : vector<4x128xf32>
    %4 = tpu.matmul %1, %0, %cst {dimension_numbers = #tpu.dot_dimension_numbers<[1], [1], [0], [0], [0, 0, 1, 0], [], []>} : vector<4x32xf32>, vector<128x32xf32>, vector<4x128xf32> -> vector<4x128xf32>
    "tpu.trace_stop"() : () -> ()
    %c0_7 = arith.constant 0 : index
    %c0_8 = arith.constant 0 : index
    %5 = vector.load %arg4[%c0_7, %c0_8] : memref<4x1xf32, #tpu.memory_space<vmem>>, vector<4x1xf32>
    %6 = vector.broadcast %5 : vector<4x1xf32> to vector<4x128xf32>
    %7 = arith.addf %4, %6 : vector<4x128xf32>
    %8 = vector.extract_strided_slice %7 {offsets = [0, 0], sizes = [1, 128], strides = [1, 1]} : vector<4x128xf32> to vector<1x128xf32>
    %9 = math.tanh %8 : vector<1x128xf32>
    %10 = vector.extract_strided_slice %3 {offsets = [0, 0], sizes = [4, 1], strides = [1, 1]} : vector<4x4xf32> to vector<4x1xf32>
    %11 = vector.broadcast %10 : vector<4x1xf32> to vector<4x128xf32>
    %12 = vector.broadcast %9 : vector<1x128xf32> to vector<4x128xf32>
    %13 = arith.mulf %11, %12 : vector<4x128xf32>
    %14 = arith.addf %7, %13 : vector<4x128xf32>
    %15 = vector.extract_strided_slice %14 {offsets = [1, 0], sizes = [1, 128], strides = [1, 1]} : vector<4x128xf32> to vector<1x128xf32>
    %16 = math.tanh %15 : vector<1x128xf32>
    %17 = vector.extract_strided_slice %3 {offsets = [0, 1], sizes = [4, 1], strides = [1, 1]} : vector<4x4xf32> to vector<4x1xf32>
    %18 = vector.broadcast %17 : vector<4x1xf32> to vector<4x128xf32>
    %19 = vector.broadcast %16 : vector<1x128xf32> to vector<4x128xf32>
    %20 = arith.mulf %18, %19 : vector<4x128xf32>
    %21 = arith.addf %14, %20 : vector<4x128xf32>
    %22 = vector.extract_strided_slice %21 {offsets = [2, 0], sizes = [1, 128], strides = [1, 1]} : vector<4x128xf32> to vector<1x128xf32>
    %23 = math.tanh %22 : vector<1x128xf32>
    %24 = vector.extract_strided_slice %3 {offsets = [0, 2], sizes = [4, 1], strides = [1, 1]} : vector<4x4xf32> to vector<4x1xf32>
    %25 = vector.broadcast %24 : vector<4x1xf32> to vector<4x128xf32>
    %26 = vector.broadcast %23 : vector<1x128xf32> to vector<4x128xf32>
    %27 = arith.mulf %25, %26 : vector<4x128xf32>
    %28 = arith.addf %21, %27 : vector<4x128xf32>
    %29 = vector.extract_strided_slice %28 {offsets = [3, 0], sizes = [1, 128], strides = [1, 1]} : vector<4x128xf32> to vector<1x128xf32>
    %30 = math.tanh %29 : vector<1x128xf32>
    %31 = tpu.concatenate %9, %16, %23, %30 in 0 : vector<1x128xf32>, vector<1x128xf32>, vector<1x128xf32>, vector<1x128xf32> -> vector<4x128xf32>
    %32 = arith.mulf %31, %31 : vector<4x128xf32>
    %cst_9 = arith.constant 1.000000e+00 : f32
    %33 = vector.broadcast %cst_9 : f32 to vector<4x128xf32>
    %34 = arith.subf %33, %32 : vector<4x128xf32>
    %c0_10 = arith.constant 0 : index
    %c0_11 = arith.constant 0 : index
    %35 = vector.load %arg5[%c0_10, %c0_11] : memref<4x1xf32, #tpu.memory_space<vmem>>, vector<4x1xf32>
    %36 = vector.broadcast %35 : vector<4x1xf32> to vector<4x128xf32>
    %37 = arith.mulf %34, %36 : vector<4x128xf32>
    %cst_12 = arith.constant 1.000000e+00 : f32
    %38 = vector.broadcast %cst_12 : f32 to vector<4x128xf32>
    %39 = arith.addf %38, %37 : vector<4x128xf32>
    %40 = math.absf %39 : vector<4x128xf32>
    %cst_13 = arith.constant 1.000000e-07 : f32
    %41 = vector.broadcast %cst_13 : f32 to vector<4x128xf32>
    %42 = arith.addf %40, %41 : vector<4x128xf32>
    %43 = math.log %42 : vector<4x128xf32>
    %c0_14 = arith.constant 0 : index
    %c0_15 = arith.constant 0 : index
    %44 = vector.load %arg8[%c0_14, %c0_15] : memref<4x128xf32, #tpu.memory_space<vmem>>, vector<4x128xf32>
    tpu.vector_store %arg8[%c0_14, %c0_15], %43 {strides = array<i32>} : memref<4x128xf32, #tpu.memory_space<vmem>>, vector<4x128xf32>,
    "tpu.trace_start"() <{level = 10 : i32, message = "lb,ld->bd"}> : () -> ()
    %cst_16 = arith.constant dense<0.000000e+00> : vector<128x32xf32>
    %45 = tpu.matmul %31, %2, %cst_16 {dimension_numbers = #tpu.dot_dimension_numbers<[0], [0], [1], [1], [0, 1, 1, 1], [], []>} : vector<4x128xf32>, vector<4x32xf32>, vector<128x32xf32> -> vector<128x32xf32>
    "tpu.trace_stop"() : () -> ()
    %46 = arith.addf %0, %45 : vector<128x32xf32>
    %c0_17 = arith.constant 0 : index
    %c0_18 = arith.constant 0 : index
    %47 = vector.load %arg7[%c0_17, %c0_18] : memref<128x32xf32, #tpu.memory_space<vmem>>, vector<128x32xf32>
    tpu.vector_store %arg7[%c0_17, %c0_18], %46 {strides = array<i32>} : memref<128x32xf32, #tpu.memory_space<vmem>>, vector<128x32xf32>,
    return
  }
  func.func @transform_0(%arg0: i32) -> (i32, i32) {
    %c0_i32 = arith.constant 0 : i32
    %c0_i32_0 = arith.constant 0 : i32
    return %arg0, %c0_i32 : i32, i32
  }
  func.func @transform_1(%arg0: i32) -> (i32, i32) {
    %c0_i32 = arith.constant 0 : i32
    %c0_i32_0 = arith.constant 0 : i32
    %c0_i32_1 = arith.constant 0 : i32
    return %c0_i32, %c0_i32_0 : i32, i32
  }
  func.func @transform_2(%arg0: i32) -> (i32, i32) {
    %c0_i32 = arith.constant 0 : i32
    %c0_i32_0 = arith.constant 0 : i32
    %c0_i32_1 = arith.constant 0 : i32
    return %c0_i32, %c0_i32_0 : i32, i32
  }
  func.func @transform_3(%arg0: i32) -> (i32, i32) {
    %c0_i32 = arith.constant 0 : i32
    %c0_i32_0 = arith.constant 0 : i32
    %c0_i32_1 = arith.constant 0 : i32
    return %c0_i32, %c0_i32_0 : i32, i32
  }
  func.func @transform_4(%arg0: i32) -> (i32, i32) {
    %c0_i32 = arith.constant 0 : i32
    %c0_i32_0 = arith.constant 0 : i32
    %c0_i32_1 = arith.constant 0 : i32
    return %c0_i32, %c0_i32_0 : i32, i32
  }
  func.func @transform_5(%arg0: i32) -> (i32, i32) {
    %c0_i32 = arith.constant 0 : i32
    %c0_i32_0 = arith.constant 0 : i32
    %c0_i32_1 = arith.constant 0 : i32
    return %c0_i32, %c0_i32_0 : i32, i32
  }
  func.func @transform_6(%arg0: i32) -> (i32, i32) {
    %c0_i32 = arith.constant 0 : i32
    %c0_i32_0 = arith.constant 0 : i32
    return %arg0, %c0_i32 : i32, i32
  }
  func.func @transform_7(%arg0: i32) -> (i32, i32) {
    %c0_i32 = arith.constant 0 : i32
    %c0_i32_0 = arith.constant 0 : i32
    return %c0_i32, %arg0 : i32, i32
  }
}

</mosaic_0001>

<llo_original>
// kernel: tpu_custom_call.1
$region0: #{tpu_custom_call.1}
  #allocation0 [shape = 'u32[]', space=smem, size = 0x4, offset = 0x4, fixed_abs, tag = 'smem constant byte address 0x4 - core index']
  #allocation1 [shape = 'u32[144,128]{1,0:T(1,128)}', space=vmem, size = 0x12000, scoped, tag = 'internal scratch']
  %s0 = inlined_call_operand.vmem [shape: f32[256,32], index: 0, kind: input, shape index: {}]
  %s1 = inlined_call_operand.vmem [shape: f32[4,32], index: 1, kind: input, shape index: {}]
  %s2 = inlined_call_operand.vmem [shape: f32[4,32], index: 2, kind: input, shape index: {}]
  %s3 = inlined_call_operand.vmem [shape: f32[4,1], index: 3, kind: input, shape index: {}]
  %s4 = inlined_call_operand.vmem [shape: f32[4,1], index: 4, kind: input, shape index: {}]
  %s5 = inlined_call_operand.vmem [shape: f32[4,4], index: 5, kind: input, shape index: {}]
  %s6 = inlined_call_operand.vmem [shape: f32[256,32], index: 6, kind: output, shape index: {0}]
  %s7 = inlined_call_operand.hbm [shape: f32[4,256], index: 7, kind: output, shape index: {1}]
  %8 = xla_tuple %s6, %s7
  %s9 = sld [smem:[#allocation0]]
  $region65: #{tpu_custom_call.1} parent=0
    _
  %s11 = ssub.s32 1, %s9
  %s12 = scalar_select 0, %s11, %s9
  $region1: #{tpu_custom_call.1} parent=0
    #allocation2 [shape = 'u8[4096]{0}', space=vmem, size = 0x1000, scoped, tag = 'output window, operand 1']
    #allocation3 [shape = 's32[2]{0}', space=sflag, size = 0x8, scoped, tag = 'scoped memory for tpu_custom_call.1']
    %13 = vsyncpa [#allocation3], 0
    %s14 = scalar_lea.sflag [#allocation3], 1
    %15 = vsyncpa %s14, 0
    loop: start=0, step=1, limit=4
    $region2: #{tpu_custom_call.1} parent=1 // loop_pre_header
      _
    $region3: #{tpu_custom_call.1} parent=1 // loop_header
      %s17 = sphi 0, %s21
      %p18 = scmp.ge.s32.totalorder %s17, 4
      %s27 = sphi 0, %s29
      %s30 = sphi 0, %s27
      %s31 = sphi 0, %s30
      %s47 = sphi 0, %s31
      %s51 = sphi 0, %s51
      %s53 = sphi 0, %s51
      %s54 = sphi 0, %s53
      %s68 = sphi 0, %s54
      %s72 = sphi 0, %s72
      %s74 = sphi 0, %s72
      %s75 = sphi 0, %s74
      %s89 = sphi 0, %s75
      %s93 = sphi 0, %s93
      %s95 = sphi 0, %s93
      %s96 = sphi 0, %s95
      %s110 = sphi 0, %s96
      %s114 = sphi 0, %s114
      %s116 = sphi 0, %s114
      %s117 = sphi 0, %s116
      %s131 = sphi 0, %s117
      %s135 = sphi 0, %s135
      %s137 = sphi 0, %s135
      %s138 = sphi 0, %s137
      %s152 = sphi 0, %s138
      %s158 = sphi 0, %s160
      %s161 = sphi 0, %s158
      %s162 = sphi 0, %s161
      %s178 = sphi 0, %s162
      %s184 = sphi 0, %s186
      %s187 = sphi 0, %s184
      %s188 = sphi 0, %s187
      %s204 = sphi 0, %s188
    $region4: #{tpu_custom_call.1} parent=1 // loop_header_branch
      %20 = sbr.rel (%p18) target = $region8
    $region5: #{tpu_custom_call.1} parent=1 // loop_body
      %s22 = ssub.s32 %s17, 1
      %s23 = ssub.s32 %s17, 2
      %s24 = sadd.s32 %s17, 1
      %s25 = ssub.s32 %s17, %s24
      %p26 = scmp.eq.s32.totalorder %s25, 0
      %s28 = sadd.s32 %s27, 1
      %s29 = scalar_select %p26, %s27, %s28
      %p32 = pneg %p26
      %p33 = scmp.eq.s32.totalorder %s17, 1
      %p34 = por %p32, %p33
      %p35 = scmp.ne.s32.totalorder %s27, %s30
      %p36 = scmp.eq.s32.totalorder %s17, 0
      %p37 = por %p35, %p36
      %p38 = scmp.ne.s32.totalorder %s27, %s30
      %p39 = scmp.eq.s32.totalorder %s22, 1
      %p40 = por %p38, %p39
      %p41 = scmp.ne.s32.totalorder %s30, %s31
      %p42 = scmp.eq.s32.totalorder %s22, 0
      %p43 = por %p41, %p42
      %p44 = scmp.ne.s32.totalorder %s30, %s31
      %p45 = scmp.eq.s32.totalorder %s23, 1
      %p46 = por %p44, %p45
      %p48 = scmp.ne.s32.totalorder %s31, %s47
      %p49 = scmp.eq.s32.totalorder %s23, 0
      %p50 = por %p48, %p49
      %s52 = sadd.s32 %s51, 1
      %p55 = scmp.eq.s32.totalorder %s17, 1
      %p56 = scmp.ne.s32.totalorder %s51, %s53
      %p57 = scmp.eq.s32.totalorder %s17, 0
      %p58 = por %p56, %p57
      %p59 = scmp.ne.s32.totalorder %s51, %s53
      %p60 = scmp.eq.s32.totalorder %s22, 1
      %p61 = por %p59, %p60
      %p62 = scmp.ne.s32.totalorder %s53, %s54
      %p63 = scmp.eq.s32.totalorder %s22, 0
      %p64 = por %p62, %p63
      %p65 = scmp.ne.s32.totalorder %s53, %s54
      %p66 = scmp.eq.s32.totalorder %s23, 1
      %p67 = por %p65, %p66
      %p69 = scmp.ne.s32.totalorder %s54, %s68
      %p70 = scmp.eq.s32.totalorder %s23, 0
      %p71 = por %p69, %p70
      %s73 = sadd.s32 %s72, 1
      %p76 = scmp.eq.s32.totalorder %s17, 1
      %p77 = scmp.ne.s32.totalorder %s72, %s74
      %p78 = scmp.eq.s32.totalorder %s17, 0
      %p79 = por %p77, %p78
      %p80 = scmp.ne.s32.totalorder %s72, %s74
      %p81 = scmp.eq.s32.totalorder %s22, 1
      %p82 = por %p80, %p81
      %p83 = scmp.ne.s32.totalorder %s74, %s75
      %p84 = scmp.eq.s32.totalorder %s22, 0
      %p85 = por %p83, %p84
      %p86 = scmp.ne.s32.totalorder %s74, %s75
      %p87 = scmp.eq.s32.totalorder %s23, 1
      %p88 = por %p86, %p87
      %p90 = scmp.ne.s32.totalorder %s75, %s89
      %p91 = scmp.eq.s32.totalorder %s23, 0
      %p92 = por %p90, %p91
      %s94 = sadd.s32 %s93, 1
      %p97 = scmp.eq.s32.totalorder %s17, 1
      %p98 = scmp.ne.s32.totalorder %s93, %s95
      %p99 = scmp.eq.s32.totalorder %s17, 0
      %p100 = por %p98, %p99
      %p101 = scmp.ne.s32.totalorder %s93, %s95
      %p102 = scmp.eq.s32.totalorder %s22, 1
      %p103 = por %p101, %p102
      %p104 = scmp.ne.s32.totalorder %s95, %s96
      %p105 = scmp.eq.s32.totalorder %s22, 0
      %p106 = por %p104, %p105
      %p107 = scmp.ne.s32.totalorder %s95, %s96
      %p108 = scmp.eq.s32.totalorder %s23, 1
      %p109 = por %p107, %p108
      %p111 = scmp.ne.s32.totalorder %s96, %s110
      %p112 = scmp.eq.s32.totalorder %s23, 0
      %p113 = por %p111, %p112
      %s115 = sadd.s32 %s114, 1
      %p118 = scmp.eq.s32.totalorder %s17, 1
      %p119 = scmp.ne.s32.totalorder %s114, %s116
      %p120 = scmp.eq.s32.totalorder %s17, 0
      %p121 = por %p119, %p120
      %p122 = scmp.ne.s32.totalorder %s114, %s116
      %p123 = scmp.eq.s32.totalorder %s22, 1
      %p124 = por %p122, %p123
      %p125 = scmp.ne.s32.totalorder %s116, %s117
      %p126 = scmp.eq.s32.totalorder %s22, 0
      %p127 = por %p125, %p126
      %p128 = scmp.ne.s32.totalorder %s116, %s117
      %p129 = scmp.eq.s32.totalorder %s23, 1
      %p130 = por %p128, %p129
      %p132 = scmp.ne.s32.totalorder %s117, %s131
      %p133 = scmp.eq.s32.totalorder %s23, 0
      %p134 = por %p132, %p133
      %s136 = sadd.s32 %s135, 1
      %p139 = scmp.eq.s32.totalorder %s17, 1
      %p140 = scmp.ne.s32.totalorder %s135, %s137
      %p141 = scmp.eq.s32.totalorder %s17, 0
      %p142 = por %p140, %p141
      %p143 = scmp.ne.s32.totalorder %s135, %s137
      %p144 = scmp.eq.s32.totalorder %s22, 1
      %p145 = por %p143, %p144
      %p146 = scmp.ne.s32.totalorder %s137, %s138
      %p147 = scmp.eq.s32.totalorder %s22, 0
      %p148 = por %p146, %p147
      %p149 = scmp.ne.s32.totalorder %s137, %s138
      %p150 = scmp.eq.s32.totalorder %s23, 1
      %p151 = por %p149, %p150
      %p153 = scmp.ne.s32.totalorder %s138, %s152
      %p154 = scmp.eq.s32.totalorder %s23, 0
      %p155 = por %p153, %p154
      %s156 = ssub.s32 %s17, %s24
      %p157 = scmp.eq.s32.totalorder %s156, 0
      %s159 = sadd.s32 %s158, 1
      %s160 = scalar_select %p157, %s158, %s159
      %p163 = pneg %p157
      %p164 = scmp.eq.s32.totalorder %s17, 1
      %p165 = por %p163, %p164
      %p166 = scmp.ne.s32.totalorder %s158, %s161
      %p167 = scmp.eq.s32.totalorder %s17, 0
      %p168 = por %p166, %p167
      %p169 = scmp.ne.s32.totalorder %s158, %s161
      %p170 = scmp.eq.s32.totalorder %s22, 1
      %p171 = por %p169, %p170
      %p172 = scmp.ne.s32.totalorder %s161, %s162
      %p173 = scmp.eq.s32.totalorder %s22, 0
      %p174 = por %p172, %p173
      %p175 = scmp.ne.s32.totalorder %s161, %s162
      %p176 = scmp.eq.s32.totalorder %s23, 1
      %p177 = por %p175, %p176
      %p179 = scmp.ne.s32.totalorder %s162, %s178
      %p180 = scmp.eq.s32.totalorder %s23, 0
      %p181 = por %p179, %p180
      %s182 = ssub.s32 %s17, %s24
      %p183 = scmp.eq.s32.totalorder %s182, 0
      %s185 = sadd.s32 %s184, 1
      %s186 = scalar_select %p183, %s184, %s185
      %p189 = pneg %p183
      %p190 = scmp.eq.s32.totalorder %s17, 1
      %p191 = por %p189, %p190
      %p192 = scmp.ne.s32.totalorder %s184, %s187
      %p193 = scmp.eq.s32.totalorder %s17, 0
      %p194 = por %p192, %p193
      %p195 = scmp.ne.s32.totalorder %s184, %s187
      %p196 = scmp.eq.s32.totalorder %s22, 1
      %p197 = por %p195, %p196
      %p198 = scmp.ne.s32.totalorder %s187, %s188
      %p199 = scmp.eq.s32.totalorder %s22, 0
      %p200 = por %p198, %p199
      %p201 = scmp.ne.s32.totalorder %s187, %s188
      %p202 = scmp.eq.s32.totalorder %s23, 1
      %p203 = por %p201, %p202
      %p205 = scmp.ne.s32.totalorder %s188, %s204
      %p206 = scmp.eq.s32.totalorder %s23, 0
      %p207 = por %p205, %p206
      %p208 = scmp.le.s32.totalorder 1, %s17
      %p209 = scmp.lt.s32.totalorder %s17, 3
      %p210 = pnand %p208, %p209
      %p211 = pneg %p210
      // Predicated region
      $region9: #{tpu_custom_call.1} parent=5 // pred_check
        _
      $region10: #{tpu_custom_call.1} parent=5 // pred_check_branch
        %213 = sbr.rel (%p210) target = $region12
      $region11: #{tpu_custom_call.1} parent=5 // pred_region
        %s214 = ssub.s32 %s17, 1
        // Predicated region
        $region13: #{tpu_custom_call.1} parent=11 // pred_check
          %p215 = pneg %p64
        $region14: #{tpu_custom_call.1} parent=11 // pred_check_branch
          %217 = sbr.rel (%p215) target = $region16
        $region15: #{tpu_custom_call.1} parent=11 // pred_region
          _
        $region16: #{tpu_custom_call.1} parent=11 // pred_fallthru
          _
        // Predicated region
        $region17: #{tpu_custom_call.1} parent=11 // pred_check
          %p218 = pneg %p85
        $region18: #{tpu_custom_call.1} parent=11 // pred_check_branch
          %220 = sbr.rel (%p218) target = $region20
        $region19: #{tpu_custom_call.1} parent=11 // pred_region
          _
        $region20: #{tpu_custom_call.1} parent=11 // pred_fallthru
          _
        // Predicated region
        $region21: #{tpu_custom_call.1} parent=11 // pred_check
          %p221 = pneg %p106
        $region22: #{tpu_custom_call.1} parent=11 // pred_check_branch
          %223 = sbr.rel (%p221) target = $region24
        $region23: #{tpu_custom_call.1} parent=11 // pred_region
          _
        $region24: #{tpu_custom_call.1} parent=11 // pred_fallthru
          _
        // Predicated region
        $region25: #{tpu_custom_call.1} parent=11 // pred_check
          %p224 = pneg %p127
        $region26: #{tpu_custom_call.1} parent=11 // pred_check_branch
          %226 = sbr.rel (%p224) target = $region28
        $region27: #{tpu_custom_call.1} parent=11 // pred_region
          _
        $region28: #{tpu_custom_call.1} parent=11 // pred_fallthru
          _
        // Predicated region
        $region29: #{tpu_custom_call.1} parent=11 // pred_check
          %p227 = pneg %p148
        $region30: #{tpu_custom_call.1} parent=11 // pred_check_branch
          %229 = sbr.rel (%p227) target = $region32
        $region31: #{tpu_custom_call.1} parent=11 // pred_region
          _
        $region32: #{tpu_custom_call.1} parent=11 // pred_fallthru
          _
      $region12: #{tpu_custom_call.1} parent=5 // pred_fallthru
        _
      %p230 = scmp.lt.s32.totalorder %s17, 2
      // Predicated region
      $region33: #{tpu_custom_call.1} parent=5 // pred_check
        %p231 = pneg %p230
      $region34: #{tpu_custom_call.1} parent=5 // pred_check_branch
        %233 = sbr.rel (%p231) target = $region36
      $region35: #{tpu_custom_call.1} parent=5 // pred_region
        // Predicated region
        $region37: #{tpu_custom_call.1} parent=35 // pred_check
          %p234 = pneg %p37
        $region38: #{tpu_custom_call.1} parent=35 // pred_check_branch
          %236 = sbr.rel (%p234) target = $region40
        $region39: #{tpu_custom_call.1} parent=35 // pred_region
          %s237 = smul.u32 16, %s17
          %p238 = scmp.lt.s32.totalorder %s237, 31
          %s239 = scalar_select %p238, %s237, 31
          %s240 = smul.addr %s239, 8
          %s241 = scalar_lea.vmem %s0, %s240
          %s242 = smul.u32 16, %s17
        $region40: #{tpu_custom_call.1} parent=35 // pred_fallthru
          _
      $region36: #{tpu_custom_call.1} parent=5 // pred_fallthru
        _
      %p243 = scmp.le.s32.totalorder 1, %s17
      %p244 = scmp.lt.s32.totalorder %s17, 3
      %p245 = pnand %p243, %p244
      %p246 = pneg %p245
      // Predicated region
      $region41: #{tpu_custom_call.1} parent=5 // pred_check
        _
      $region42: #{tpu_custom_call.1} parent=5 // pred_check_branch
        %248 = sbr.rel (%p245) target = $region44
      $region43: #{tpu_custom_call.1} parent=5 // pred_region
        %s249 = ssub.s32 %s17, 1
        %s250 = smul.u32 16, %s22
        %p251 = scmp.lt.s32.totalorder %s250, 31
        %s252 = scalar_select %p251, %s250, 31
        %s253 = smul.addr %s252, 8
        %s254 = scalar_lea.vmem %s0, %s253
        %p255 = pneg %p43
        %p256 = pneg %p40
        %p257 = pneg %p64
        %p258 = pneg %p61
        %p259 = pneg %p85
        %p260 = pneg %p82
        %p261 = pneg %p106
        %p262 = pneg %p103
        %p263 = pneg %p127
        %p264 = pneg %p124
        %p265 = pneg %p148
        %p266 = pneg %p145
        %p267 = pneg %p174
        %p268 = pneg %p171
        %s269 = smul.u32 16, %s22
        %p270 = scmp.lt.s32.totalorder %s269, 31
        %s271 = scalar_select %p270, %s269, 31
        %s272 = smul.addr %s271, 8
        %s273 = scalar_lea.vmem %s6, %s272
        %p274 = pneg %p200
        %p275 = pneg %p197
        %s276 = sand.u32 %s187, 1
        %s277 = scalar_lea.sflag [#allocation3], %s276
        %s278 = sand.u32 %s187, 1
        %s279 = smul.addr %s278, 4
        %s280 = scalar_lea.vmem [#allocation2], %s279
        %s281 = smul.u32 16, %s22
        %p282 = scmp.lt.s32.totalorder %s281, 31
        %s283 = scalar_select %p282, %s281, 31
        %s284 = smul.addr %s283, 8
        %s285 = scalar_lea.vmem %s0, %s284
        %s286 = smul.u32 16, %s22
        %s287 = smul.u32 16, %s22
        %p288 = scmp.lt.s32.totalorder %s287, 31
        %s289 = scalar_select %p288, %s287, 31
        %s290 = smul.addr %s289, 8
        %s291 = scalar_lea.vmem %s6, %s290
        %s292 = smul.u32 16, %s22
        %v293 = vld [vmem:[%s285] sm:$0xff]
        %v294 = vld [vmem:[%s285 + $0x8] sm:$0xff]
        %v295 = vld [vmem:[%s285 + $0x10] sm:$0xff]
        %v296 = vld [vmem:[%s285 + $0x18] sm:$0xff]
        %v297 = vld [vmem:[%s285 + $0x20] sm:$0xff]
        %v298 = vld [vmem:[%s285 + $0x28] sm:$0xff]
        %v299 = vld [vmem:[%s285 + $0x30] sm:$0xff]
        %v300 = vld [vmem:[%s285 + $0x38] sm:$0xff]
        %v301 = vld [vmem:[%s285 + $0x40] sm:$0xff]
        %v302 = vld [vmem:[%s285 + $0x48] sm:$0xff]
        %v303 = vld [vmem:[%s285 + $0x50] sm:$0xff]
        %v304 = vld [vmem:[%s285 + $0x58] sm:$0xff]
        %v305 = vld [vmem:[%s285 + $0x60] sm:$0xff]
        %v306 = vld [vmem:[%s285 + $0x68] sm:$0xff]
        %v307 = vld [vmem:[%s285 + $0x70] sm:$0xff]
        %v308 = vld [vmem:[%s285 + $0x78] sm:$0xff]
        %v309 = vld [vmem:[%s1] sm:$0xf]
        %v310 = vld [vmem:[%s2] sm:$0xf]
        %v311 = vld [vmem:[%s5] sm:$0xf]
        %v312 = vld [vmem:[%s3] sm:$0xf]
        %314 = vset.pattern.permute.xlu0 0
        %315 = vperm.xlu0 %314, %v312
        %v316 = vpop.permute.xlu0 %315
        %vm318 = vcmask 261120
        %v320 = vsel %vm318, %v309, 0
        %v323 = vsel %vm318, %v293, 0
        %v326 = vsel %vm318, %v294, 0
        %v329 = vsel %vm318, %v295, 0
        %v332 = vsel %vm318, %v296, 0
        %v335 = vsel %vm318, %v297, 0
        %v338 = vsel %vm318, %v298, 0
        %v341 = vsel %vm318, %v299, 0
        %v344 = vsel %vm318, %v300, 0
        %v347 = vsel %vm318, %v301, 0
        %v350 = vsel %vm318, %v302, 0
        %v353 = vsel %vm318, %v303, 0
        %v356 = vsel %vm318, %v304, 0
        %v359 = vsel %vm318, %v305, 0
        %v362 = vsel %vm318, %v306, 0
        %v365 = vsel %vm318, %v307, 0
        %v368 = vsel %vm318, %v308, 0
        %370 = vmatprep.subr.mxu0 0.0
        %371 = vmatpush1.xpose.msra.mxu0 %v323
        %372 = vmatprep.subr.mxu0 0.0
        %373 = vmatpush1.xpose.msra.mxu0 %v326
        %374 = vmatprep.subr.mxu0 0.0
        %375 = vmatpush1.xpose.msra.mxu0 %v329
        %376 = vmatprep.subr.mxu0 0.0
        %377 = vmatpush1.xpose.msra.mxu0 %v332
        %378 = vmatprep.subr.mxu0 0.0
        %379 = vmatpush1.xpose.msra.mxu0 %v335
        %380 = vmatprep.subr.mxu0 0.0
        %381 = vmatpush1.xpose.msra.mxu0 %v338
        %382 = vmatprep.subr.mxu0 0.0
        %383 = vmatpush1.xpose.msra.mxu0 %v341
        %384 = vmatprep.subr.mxu0 0.0
        %385 = vmatpush1.xpose.msra.mxu0 %v344
        %386 = vmatprep.subr.mxu0 0.0
        %387 = vmatpush1.xpose.msra.mxu0 %v347
        %388 = vmatprep.subr.mxu0 0.0
        %389 = vmatpush1.xpose.msra.mxu0 %v350
        %390 = vmatprep.subr.mxu0 0.0
        %391 = vmatpush1.xpose.msra.mxu0 %v353
        %392 = vmatprep.subr.mxu0 0.0
        %393 = vmatpush1.xpose.msra.mxu0 %v356
        %394 = vmatprep.subr.mxu0 0.0
        %395 = vmatpush1.xpose.msra.mxu0 %v359
        %396 = vmatprep.subr.mxu0 0.0
        %397 = vmatpush1.xpose.msra.mxu0 %v362
        %398 = vmatprep.subr.mxu0 0.0
        %399 = vmatpush1.xpose.msra.mxu0 %v365
        %400 = vmatprep.subr.mxu0 0.0
        %401 = vmatpush1.xpose.msra.mxu0 %v368
        %402 = vmatprep.subr.mxu0 0.0
        %403 = vmatpush1.xpose.msra.mxu0 0.0
        %404 = vmatprep.subr.mxu0 0.0
        %405 = vmatpush1.xpose.msra.mxu0 0.0
        %406 = vmatprep.subr.mxu0 0.0
        %407 = vmatpush1.xpose.msra.mxu0 0.0
        %408 = vmatprep.subr.mxu0 0.0
        %409 = vmatpush1.xpose.msra.mxu0 0.0
        %410 = vmatprep.subr.mxu0 0.0
        %411 = vmatpush1.xpose.msra.mxu0 0.0
        %412 = vmatprep.subr.mxu0 0.0
        %413 = vmatpush1.xpose.msra.mxu0 0.0
        %414 = vmatprep.subr.mxu0 0.0
        %415 = vmatpush1.xpose.msra.mxu0 0.0
        %416 = vmatprep.subr.mxu0 0.0
        %417 = vmatpush1.xpose.msra.mxu0 0.0
        %418 = vmatprep.subr.mxu0 0.0
        %419 = vmatpush1.xpose.msra.mxu0 0.0
        %420 = vmatprep.subr.mxu0 0.0
        %421 = vmatpush1.xpose.msra.mxu0 0.0
        %422 = vmatprep.subr.mxu0 0.0
        %423 = vmatpush1.xpose.msra.mxu0 0.0
        %424 = vmatprep.subr.mxu0 0.0
        %425 = vmatpush1.xpose.msra.mxu0 0.0
        %426 = vmatprep.subr.mxu0 0.0
        %427 = vmatpush1.xpose.msra.mxu0 0.0
        %428 = vmatprep.subr.mxu0 0.0
        %429 = vmatpush1.xpose.msra.mxu0 0.0
        %430 = vmatprep.subr.mxu0 0.0
        %431 = vmatpush1.xpose.msra.mxu0 0.0
        %432 = vmatprep.subr.mxu0 0.0
        %433 = vmatpush1.xpose.msra.mxu0 0.0
        %434 = vmatprep.mubr.f32.mxu0 0.0
        %435 = vmatmul.mubr.f32.gmra.mrb[0].mxu0 %v320
        %v436 = vpop.f32.mrb[0].mxu0
        %v437 = vadd.f32 %v316, %v436
        %v438 = vpop.f32.mrb[0].mxu0
        %439 = vdwg.mxu0
        %v440 = vtanh.pop %v437
        %442 = vset.pattern.permute.xlu0 0
        %443 = vperm.xlu0 %442, %v311
        %v444 = vpop.permute.xlu0 %443
        %v446 = vlaneseq
        %v447 = vshrl.u32 %v446, 7
        %v448 = vsub.s32 0, %v447
        %v449 = vrot.slane %v440, %v448
        %v450 = vmul.f32 %v444, %v449
        %v451 = vadd.f32 %v437, %v450
        %v452 = vtanh.pop %v451
        %453 = vset.pattern.permute.xlu0 1
        %454 = vperm.xlu0 %453, %v311
        %v455 = vpop.permute.xlu0 %454
        %v457 = vlaneseq
        %v458 = vshrl.u32 %v457, 7
        %v459 = vsub.s32 1, %v458
        %v460 = vrot.slane %v452, %v459
        %v461 = vmul.f32 %v455, %v460
        %v462 = vadd.f32 %v451, %v461
        %v463 = vtanh.pop %v462
        %464 = vset.pattern.permute.xlu0 2
        %465 = vperm.xlu0 %464, %v311
        %v466 = vpop.permute.xlu0 %465
        %v468 = vlaneseq
        %v469 = vshrl.u32 %v468, 7
        %v470 = vsub.s32 2, %v469
        %v471 = vrot.slane %v463, %v470
        %v472 = vmul.f32 %v466, %v471
        %v473 = vadd.f32 %v462, %v472
        %v474 = vtanh.pop %v473
        %vm475 = vcmask 1040384
        %v476 = vsel %vm475, %v440, %v452
        %vm477 = vcmask 1041408
        %v478 = vsel %vm477, %v476, %v463
        %vm479 = vcmask 1042432
        %v480 = vsel %vm479, %v478, %v474
        %v481 = vmul.f32 %v480, %v480
        %v482 = vsub.f32 1.0, %v481
        %v483 = vld [vmem:[%s4] sm:$0xf]
        %485 = vset.pattern.permute.xlu0 0
        %486 = vperm.xlu0 %485, %v483
        %v487 = vpop.permute.xlu0 %486
        %v489 = vmul.f32 %v482, %v487
        %v490 = vadd.f32 %v489, 1.0
        %v491 = vand.u32 2147483647, %v490
        %v492 = vadd.f32 %v491, 1e-07
        %v493 = vlog2.pop %v492
        %v494 = vmul.f32 %v493, 0.6931472
        %495 = vst [vmem:[%s280] sm:$0xf] %v494
        %496 = vxpose.xlu0.b32.start [1/16] %v480, 128
        %497 = vxpose.xlu0.b32.cont [2/16] 0.0, 128
        %498 = vxpose.xlu0.b32.cont [3/16] 0.0, 128
        %499 = vxpose.xlu0.b32.cont [4/16] 0.0, 128
        %500 = vxpose.xlu0.b32.cont [5/16] 0.0, 128
        %501 = vxpose.xlu0.b32.cont [6/16] 0.0, 128
        %502 = vxpose.xlu0.b32.cont [7/16] 0.0, 128
        %503 = vxpose.xlu0.b32.cont [8/16] 0.0, 128
        %504 = vxpose.xlu0.b32.cont [9/16] 0.0, 128
        %505 = vxpose.xlu0.b32.cont [10/16] 0.0, 128
        %506 = vxpose.xlu0.b32.cont [11/16] 0.0, 128
        %507 = vxpose.xlu0.b32.cont [12/16] 0.0, 128
        %508 = vxpose.xlu0.b32.cont [13/16] 0.0, 128
        %509 = vxpose.xlu0.b32.cont [14/16] 0.0, 128
        %510 = vxpose.xlu0.b32.cont [15/16] 0.0, 128
        %511 = vxpose.xlu0.b32.end [16/16] 0.0, 128
        %v512 = vpop.trf.xlu0
        %v513 = vpop.trf.xlu0
        %v514 = vpop.trf.xlu0
        %v515 = vpop.trf.xlu0
        %v516 = vpop.trf.xlu0
        %v517 = vpop.trf.xlu0
        %v518 = vpop.trf.xlu0
        %v519 = vpop.trf.xlu0
        %v520 = vpop.trf.xlu0
        %v521 = vpop.trf.xlu0
        %v522 = vpop.trf.xlu0
        %v523 = vpop.trf.xlu0
        %v524 = vpop.trf.xlu0
        %v525 = vpop.trf.xlu0
        %v526 = vpop.trf.xlu0
        %v527 = vpop.trf.xlu0
        %vm528 = vcmask 31744
        %v530 = vsel %vm528, %v512, 0
        %v533 = vsel %vm528, %v513, 0
        %v536 = vsel %vm528, %v514, 0
        %v539 = vsel %vm528, %v515, 0
        %v542 = vsel %vm528, %v516, 0
        %v545 = vsel %vm528, %v517, 0
        %v548 = vsel %vm528, %v518, 0
        %v551 = vsel %vm528, %v519, 0
        %v554 = vsel %vm528, %v520, 0
        %v557 = vsel %vm528, %v521, 0
        %v560 = vsel %vm528, %v522, 0
        %v563 = vsel %vm528, %v523, 0
        %v566 = vsel %vm528, %v524, 0
        %v569 = vsel %vm528, %v525, 0
        %v572 = vsel %vm528, %v526, 0
        %v575 = vsel %vm528, %v527, 0
        %vm577 = vcmask 1043456
        %v579 = vsel %vm577, %v310, 0
        %581 = vmatprep.subr.mxu0 0.0
        %582 = vmatpush1.msra.mxu0 %v579
        %583 = vmatprep.subr.mxu0 0.0
        %584 = vmatpush1.msra.mxu0 0.0
        %585 = vmatprep.subr.mxu0 0.0
        %586 = vmatpush1.msra.mxu0 0.0
        %587 = vmatprep.subr.mxu0 0.0
        %588 = vmatpush1.msra.mxu0 0.0
        %589 = vmatprep.subr.mxu0 0.0
        %590 = vmatpush1.msra.mxu0 0.0
        %591 = vmatprep.subr.mxu0 0.0
        %592 = vmatpush1.msra.mxu0 0.0
        %593 = vmatprep.subr.mxu0 0.0
        %594 = vmatpush1.msra.mxu0 0.0
        %595 = vmatprep.subr.mxu0 0.0
        %596 = vmatpush1.msra.mxu0 0.0
        %597 = vmatprep.subr.mxu0 0.0
        %598 = vmatpush1.msra.mxu0 0.0
        %599 = vmatprep.subr.mxu0 0.0
        %600 = vmatpush1.msra.mxu0 0.0
        %601 = vmatprep.subr.mxu0 0.0
        %602 = vmatpush1.msra.mxu0 0.0
        %603 = vmatprep.subr.mxu0 0.0
        %604 = vmatpush1.msra.mxu0 0.0
        %605 = vmatprep.subr.mxu0 0.0
        %606 = vmatpush1.msra.mxu0 0.0
        %607 = vmatprep.subr.mxu0 0.0
        %608 = vmatpush1.msra.mxu0 0.0
        %609 = vmatprep.subr.mxu0 0.0
        %610 = vmatpush1.msra.mxu0 0.0
        %611 = vmatprep.subr.mxu0 0.0
        %612 = vmatpush1.msra.mxu0 0.0
        %613 = vmatprep.subr.mxu0 0.0
        %614 = vmatpush1.msra.mxu0 0.0
        %615 = vmatprep.subr.mxu0 0.0
        %616 = vmatpush1.msra.mxu0 0.0
        %617 = vmatprep.subr.mxu0 0.0
        %618 = vmatpush1.msra.mxu0 0.0
        %619 = vmatprep.subr.mxu0 0.0
        %620 = vmatpush1.msra.mxu0 0.0
        %621 = vmatprep.subr.mxu0 0.0
        %622 = vmatpush1.msra.mxu0 0.0
        %623 = vmatprep.subr.mxu0 0.0
        %624 = vmatpush1.msra.mxu0 0.0
        %625 = vmatprep.subr.mxu0 0.0
        %626 = vmatpush1.msra.mxu0 0.0
        %627 = vmatprep.subr.mxu0 0.0
        %628 = vmatpush1.msra.mxu0 0.0
        %629 = vmatprep.subr.mxu0 0.0
        %630 = vmatpush1.msra.mxu0 0.0
        %631 = vmatprep.subr.mxu0 0.0
        %632 = vmatpush1.msra.mxu0 0.0
        %633 = vmatprep.subr.mxu0 0.0
        %634 = vmatpush1.msra.mxu0 0.0
        %635 = vmatprep.subr.mxu0 0.0
        %636 = vmatpush1.msra.mxu0 0.0
        %637 = vmatprep.subr.mxu0 0.0
        %638 = vmatpush1.msra.mxu0 0.0
        %639 = vmatprep.subr.mxu0 0.0
        %640 = vmatpush1.msra.mxu0 0.0
        %641 = vmatprep.subr.mxu0 0.0
        %642 = vmatpush1.msra.mxu0 0.0
        %643 = vmatprep.subr.mxu0 0.0
        %644 = vmatpush1.msra.mxu0 0.0
        %645 = vmatprep.mubr.f32.mxu0 0.0
        %646 = vmatmul.mubr.f32.gmra.mrb[0].mxu0 %v530
        %v647 = vpop.f32.mrb[0].mxu0
        %v648 = vadd.f32 0.0, %v647
        %v649 = vpop.f32.mrb[0].mxu0
        %650 = vmatprep.mubr.f32.mxu0 0.0
        %651 = vmatmul.mubr.f32.gmra.mrb[0].mxu0 %v533
        %v652 = vpop.f32.mrb[0].mxu0
        %v653 = vadd.f32 0.0, %v652
        %v654 = vpop.f32.mrb[0].mxu0
        %655 = vmatprep.mubr.f32.mxu0 0.0
        %656 = vmatmul.mubr.f32.gmra.mrb[0].mxu0 %v536
        %v657 = vpop.f32.mrb[0].mxu0
        %v658 = vadd.f32 0.0, %v657
        %v659 = vpop.f32.mrb[0].mxu0
        %660 = vmatprep.mubr.f32.mxu0 0.0
        %661 = vmatmul.mubr.f32.gmra.mrb[0].mxu0 %v539
        %v662 = vpop.f32.mrb[0].mxu0
        %v663 = vadd.f32 0.0, %v662
        %v664 = vpop.f32.mrb[0].mxu0
        %665 = vmatprep.mubr.f32.mxu0 0.0
        %666 = vmatmul.mubr.f32.gmra.mrb[0].mxu0 %v542
        %v667 = vpop.f32.mrb[0].mxu0
        %v668 = vadd.f32 0.0, %v667
        %v669 = vpop.f32.mrb[0].mxu0
        %670 = vmatprep.mubr.f32.mxu0 0.0
        %671 = vmatmul.mubr.f32.gmra.mrb[0].mxu0 %v545
        %v672 = vpop.f32.mrb[0].mxu0
        %v673 = vadd.f32 0.0, %v672
        %v674 = vpop.f32.mrb[0].mxu0
        %675 = vmatprep.mubr.f32.mxu0 0.0
        %676 = vmatmul.mubr.f32.gmra.mrb[0].mxu0 %v548
        %v677 = vpop.f32.mrb[0].mxu0
        %v678 = vadd.f32 0.0, %v677
        %v679 = vpop.f32.mrb[0].mxu0
        %680 = vmatprep.mubr.f32.mxu0 0.0
        %681 = vmatmul.mubr.f32.gmra.mrb[0].mxu0 %v551
        %v682 = vpop.f32.mrb[0].mxu0
        %v683 = vadd.f32 0.0, %v682
        %v684 = vpop.f32.mrb[0].mxu0
        %685 = vmatprep.mubr.f32.mxu0 0.0
        %686 = vmatmul.mubr.f32.gmra.mrb[0].mxu0 %v554
        %v687 = vpop.f32.mrb[0].mxu0
        %v688 = vadd.f32 0.0, %v687
        %v689 = vpop.f32.mrb[0].mxu0
        %690 = vmatprep.mubr.f32.mxu0 0.0
        %691 = vmatmul.mubr.f32.gmra.mrb[0].mxu0 %v557
        %v692 = vpop.f32.mrb[0].mxu0
        %v693 = vadd.f32 0.0, %v692
        %v694 = vpop.f32.mrb[0].mxu0
        %695 = vmatprep.mubr.f32.mxu0 0.0
        %696 = vmatmul.mubr.f32.gmra.mrb[0].mxu0 %v560
        %v697 = vpop.f32.mrb[0].mxu0
        %v698 = vadd.f32 0.0, %v697
        %v699 = vpop.f32.mrb[0].mxu0
        %700 = vmatprep.mubr.f32.mxu0 0.0
        %701 = vmatmul.mubr.f32.gmra.mrb[0].mxu0 %v563
        %v702 = vpop.f32.mrb[0].mxu0
        %v703 = vadd.f32 0.0, %v702
        %v704 = vpop.f32.mrb[0].mxu0
        %705 = vmatprep.mubr.f32.mxu0 0.0
        %706 = vmatmul.mubr.f32.gmra.mrb[0].mxu0 %v566
        %v707 = vpop.f32.mrb[0].mxu0
        %v708 = vadd.f32 0.0, %v707
        %v709 = vpop.f32.mrb[0].mxu0
        %710 = vmatprep.mubr.f32.mxu0 0.0
        %711 = vmatmul.mubr.f32.gmra.mrb[0].mxu0 %v569
        %v712 = vpop.f32.mrb[0].mxu0
        %v713 = vadd.f32 0.0, %v712
        %v714 = vpop.f32.mrb[0].mxu0
        %715 = vmatprep.mubr.f32.mxu0 0.0
        %716 = vmatmul.mubr.f32.gmra.mrb[0].mxu0 %v572
        %v717 = vpop.f32.mrb[0].mxu0
        %v718 = vadd.f32 0.0, %v717
        %v719 = vpop.f32.mrb[0].mxu0
        %720 = vmatprep.mubr.f32.mxu0 0.0
        %721 = vmatmul.mubr.f32.gmra.mrb[0].mxu0 %v575
        %v722 = vpop.f32.mrb[0].mxu0
        %v723 = vadd.f32 0.0, %v722
        %v724 = vpop.f32.mrb[0].mxu0
        %725 = vdwg.mxu0
        %v726 = vadd.f32 %v293, %v648
        %v727 = vadd.f32 %v294, %v653
        %v728 = vadd.f32 %v295, %v658
        %v729 = vadd.f32 %v296, %v663
        %v730 = vadd.f32 %v297, %v668
        %v731 = vadd.f32 %v298, %v673
        %v732 = vadd.f32 %v299, %v678
        %v733 = vadd.f32 %v300, %v683
        %v734 = vadd.f32 %v301, %v688
        %v735 = vadd.f32 %v302, %v693
        %v736 = vadd.f32 %v303, %v698
        %v737 = vadd.f32 %v304, %v703
        %v738 = vadd.f32 %v305, %v708
        %v739 = vadd.f32 %v306, %v713
        %v740 = vadd.f32 %v307, %v718
        %v741 = vadd.f32 %v308, %v723
        %742 = vst.msk [vmem:[%s291] sm:$0xff] %vm318, %v726
        %743 = vst.msk [vmem:[%s291 + $0x8] sm:$0xff] %vm318, %v727
        %744 = vst.msk [vmem:[%s291 + $0x10] sm:$0xff] %vm318, %v728
        %745 = vst.msk [vmem:[%s291 + $0x18] sm:$0xff] %vm318, %v729
        %746 = vst.msk [vmem:[%s291 + $0x20] sm:$0xff] %vm318, %v730
        %747 = vst.msk [vmem:[%s291 + $0x28] sm:$0xff] %vm318, %v731
        %748 = vst.msk [vmem:[%s291 + $0x30] sm:$0xff] %vm318, %v732
        %749 = vst.msk [vmem:[%s291 + $0x38] sm:$0xff] %vm318, %v733
        %750 = vst.msk [vmem:[%s291 + $0x40] sm:$0xff] %vm318, %v734
        %751 = vst.msk [vmem:[%s291 + $0x48] sm:$0xff] %vm318, %v735
        %752 = vst.msk [vmem:[%s291 + $0x50] sm:$0xff] %vm318, %v736
        %753 = vst.msk [vmem:[%s291 + $0x58] sm:$0xff] %vm318, %v737
        %754 = vst.msk [vmem:[%s291 + $0x60] sm:$0xff] %vm318, %v738
        %755 = vst.msk [vmem:[%s291 + $0x68] sm:$0xff] %vm318, %v739
        %756 = vst.msk [vmem:[%s291 + $0x70] sm:$0xff] %vm318, %v740
        %757 = vst.msk [vmem:[%s291 + $0x78] sm:$0xff] %vm318, %v741
        %s758 = smul.u32 16, %s22
        %p759 = scmp.lt.s32.totalorder %s758, 31
        %s760 = scalar_select %p759, %s758, 31
        %s761 = smul.addr %s760, 8
        %s762 = scalar_lea.vmem %s6, %s761
        %s763 = sand.u32 %s187, 1
        %s764 = scalar_lea.sflag [#allocation3], %s763
        %s765 = sand.u32 %s187, 1
        %s766 = smul.addr %s765, 4
        %s767 = scalar_lea.vmem [#allocation2], %s766
        // Predicated region
        $region45: #{tpu_custom_call.1} parent=43 // pred_check
          %p768 = pneg %p171
        $region46: #{tpu_custom_call.1} parent=43 // pred_check_branch
          %770 = sbr.rel (%p768) target = $region48
        $region47: #{tpu_custom_call.1} parent=43 // pred_region
          %s771 = smul.u32 16, %s22
        $region48: #{tpu_custom_call.1} parent=43 // pred_fallthru
          _
        // Predicated region
        $region49: #{tpu_custom_call.1} parent=43 // pred_check
          %p772 = pneg %p197
        $region50: #{tpu_custom_call.1} parent=43 // pred_check_branch
          %774 = sbr.rel (%p772) target = $region52
        $region51: #{tpu_custom_call.1} parent=43 // pred_region
          %s776 = ssub.s32 64, 64
          %777 = vsyncadd %s764, %s776
          %s778 = smul.addr %s22, 64
          %s779 = scalar_lea.hbm %s7, %s778
          %s781 = sshll.u32 %s767, 4
          %s782 = int_to_ptr.vmem [resolvable:$true] %s781
          %784 = dma.vmem_to_hbm [thread:$0]  %s782, 64, %s779, %s764
        $region52: #{tpu_custom_call.1} parent=43 // pred_fallthru
          _
      $region44: #{tpu_custom_call.1} parent=5 // pred_fallthru
        _
      %p785 = scmp.le.s32.totalorder 2, %s17
      // Predicated region
      $region53: #{tpu_custom_call.1} parent=5 // pred_check
        %p786 = pneg %p785
      $region54: #{tpu_custom_call.1} parent=5 // pred_check_branch
        %788 = sbr.rel (%p786) target = $region56
      $region55: #{tpu_custom_call.1} parent=5 // pred_region
        %s789 = ssub.s32 %s17, 2
        // Predicated region
        $region57: #{tpu_custom_call.1} parent=55 // pred_check
          %p790 = pneg %p177
        $region58: #{tpu_custom_call.1} parent=55 // pred_check_branch
          %792 = sbr.rel (%p790) target = $region60
        $region59: #{tpu_custom_call.1} parent=55 // pred_region
          %s793 = smul.u32 16, %s23
          %p794 = scmp.lt.s32.totalorder %s793, 31
          %s795 = scalar_select %p794, %s793, 31
          %s796 = smul.addr %s795, 8
          %s797 = scalar_lea.vmem %s6, %s796
        $region60: #{tpu_custom_call.1} parent=55 // pred_fallthru
          _
        // Predicated region
        $region61: #{tpu_custom_call.1} parent=55 // pred_check
          %p798 = pneg %p203
        $region62: #{tpu_custom_call.1} parent=55 // pred_check_branch
          %800 = sbr.rel (%p798) target = $region64
        $region63: #{tpu_custom_call.1} parent=55 // pred_region
          %s801 = sand.u32 %s188, 1
          %s802 = scalar_lea.sflag [#allocation3], %s801
          %s803 = sand.u32 %s188, 1
          %s804 = smul.addr %s803, 4
          %s805 = scalar_lea.vmem [#allocation2], %s804
          %806 = dma.done %s802, 64
        $region64: #{tpu_custom_call.1} parent=55 // pred_fallthru
          _
      $region56: #{tpu_custom_call.1} parent=5 // pred_fallthru
        _
    $region6: #{tpu_custom_call.1} parent=1 // loop_footer
      %s21 = sadd.s32 1, %s17
    $region7: #{tpu_custom_call.1} parent=1 // loop_footer_branch
      %16 = sbr.rel target = $region3
    $region8: #{tpu_custom_call.1} parent=1 // loop_exit
      _
    %807 = vsyncpa [#allocation3], 1
    %s808 = scalar_lea.sflag [#allocation3], 1
    %809 = vsyncpa %s808, 1

</llo_original>
